<compile_context>
chip_gen: v5e
topology: v5e:2x2
jax: 0.10.0
libtpu: 0.0.40
codegen_flags: <defaults>
</compile_context>

<pallas_src>
import functools

import jax
import jax.numpy as jnp
from jax.experimental import pallas as pl
from jax.experimental.pallas import tpu as pltpu


def _round_up(x, m):
    return (x + m - 1) // m * m


_VMEM_CAP_BYTES = None


def _vmem_cap_bytes():
    """~80% of physical per-core VMEM (generation-aware), cached."""
    global _VMEM_CAP_BYTES
    if _VMEM_CAP_BYTES is None:
        try:
            phys = int(pltpu.get_tpu_info().vmem_capacity_bytes)
        except Exception:
            phys = 64 << 20          # conservative fallback (v7x per-TC size)
        _VMEM_CAP_BYTES = max(int(phys * 0.8), 32 << 20)
    return _VMEM_CAP_BYTES


def _mlp_head_kernel(x_ref, w1_ref, b1_ref, w2_ref, b2_ref, o_ref, acc_ref):
    # x:   [tm, tk]        bf16 tile of flattened pooled features
    # w1:  [tk, h_pad]     bf16 tile of fc1 weight, (in, out) layout
    # b1:  [1, h_pad]      fp32 (grid-invariant)
    # w2:  [h_pad, h_pad]  bf16, (in, out) layout (grid-invariant)
    # b2:  [1, h_pad]      fp32 (grid-invariant)
    # o:   [tm, h_pad]
    # acc: [tm, h_pad]     fp32 accumulator, lives across the K grid axis
    k = pl.program_id(1)

    @pl.when(k == 0)
    def _():
        acc_ref[...] = jnp.zeros_like(acc_ref)

    # fc1 partial sum: native [M,K] x [K,N] MXU feed (weights pre-transposed).
    acc_ref[...] += jnp.dot(x_ref[...], w1_ref[...],
                            preferred_element_type=jnp.float32)

    # Finalize only on the last K step: bias + ReLU, fc2, bias + ReLU.
    @pl.when(k == pl.num_programs(1) - 1)
    def _():
        h = jnp.maximum(acc_ref[...] + b1_ref[...], 0.0)         # fc1 bias+ReLU
        y = jnp.dot(h.astype(w2_ref.dtype), w2_ref[...],
                    preferred_element_type=jnp.float32) + b2_ref[...]
        o_ref[...] = jnp.maximum(y, 0.0).astype(o_ref.dtype)     # fc2 bias+ReLU


def prepare_params(fc1_w, fc1_b, fc2_w, fc2_b, *, tk=1024):
    """One-time parameter prep (hoisted out of the per-call forward).

    fc1_w: [H, D_in] (PyTorch Linear layout), fc1_b: [H]
    fc2_w: [H, H],                            fc2_b: [H]
    Returns ((w1_t, b1_p, w2_t, b2_p), tk) with weights cast to bf16,
    transposed to (in, out) order and zero-padded; tk is the K tile actually
    used for padding (multiple of 128, <= requested).
    """
    hidden, d_in = fc1_w.shape
    h_pad = _round_up(hidden, 128)
    tk = _round_up(min(tk, _round_up(d_in, 128)), 128)
    k_pad = _round_up(d_in, tk)

    w1_t = jnp.pad(fc1_w.astype(jnp.bfloat16).T,
                   ((0, k_pad - d_in), (0, h_pad - hidden)))
    w2_t = jnp.pad(fc2_w.astype(jnp.bfloat16).T,
                   ((0, h_pad - hidden), (0, h_pad - hidden)))
    b1_p = jnp.pad(fc1_b.astype(jnp.float32), (0, h_pad - hidden)).reshape(1, h_pad)
    b2_p = jnp.pad(fc2_b.astype(jnp.float32), (0, h_pad - hidden)).reshape(1, h_pad)
    return (w1_t, b1_p, w2_t, b2_p), tk


@functools.partial(jax.jit, static_argnames=("hidden_dim", "tm", "tk"))
def roi_2mlp_head_forward(x_pooled, w1_t, b1_p, w2_t, b2_p, *,
                          hidden_dim, tm=None, tk=1024):
    """x_pooled: [N, C, R, R] pooled ROI features (NCHW). Returns [N, hidden_dim]."""
    n = x_pooled.shape[0]
    x_flat = x_pooled.reshape(n, -1)          # glue: view(batch, -1)
    d_in = x_flat.shape[1]
    k_pad, h_pad = w1_t.shape
    out_dtype = x_pooled.dtype

    if d_in > k_pad:
        raise ValueError("prepare_params was built for a smaller input dim")
    tk = min(tk, k_pad)
    if k_pad % tk != 0:
        raise ValueError("tk must divide the padded K dim from prepare_params")

    # Row tile plan: for small N a single sublane-aligned block; otherwise a
    # 256-multiple tile up to 1024, split into >= 2 blocks (v7x dual-TC) while
    # keeping w1 re-streaming to a minimum.
    if tm is None:
        n8 = _round_up(n, 8)
        if n8 <= 256:
            tm = n8
        else:
            tm = min(1024, _round_up((n8 + 1) // 2, 256))
    else:
        tm = _round_up(min(tm, _round_up(n, 8)), 8)
    n_pad = _round_up(n, tm)

    # Only the activations need per-call padding/casting (weights pre-prepped).
    x_p = jnp.pad(x_flat.astype(jnp.bfloat16),
                  ((0, n_pad - n), (0, k_pad - d_in)))

    grid = (n_pad // tm, k_pad // tk)

    # Explicit VMEM budget (double-buffered pipelined tiles + resident
    # w2/biases + fp32 accumulator), with headroom, capped generation-aware.
    out_isize = jnp.dtype(out_dtype).itemsize
    vmem_bytes = (
        2 * tm * tk * 2              # x tiles (bf16, double-buffered)
        + 2 * tk * h_pad * 2         # w1 tiles (bf16, double-buffered)
        + 2 * h_pad * h_pad * 2      # w2 (grid-invariant, conservative 2x)
        + 4 * h_pad * 4              # biases
        + tm * h_pad * 4             # fp32 accumulator
        + 2 * tm * h_pad * out_isize)  # output tiles
    vmem_limit = int(min(max(vmem_bytes * 3 // 2, 32 << 20), _vmem_cap_bytes()))

    out_padded = pl.pallas_call(
        _mlp_head_kernel,
        out_shape=jax.ShapeDtypeStruct((n_pad, h_pad), out_dtype),
        grid_spec=pltpu.PrefetchScalarGridSpec(
            num_scalar_prefetch=0,
            grid=grid,
            in_specs=[
                pl.BlockSpec((tm, tk), lambda i, k: (i, k)),        # x
                pl.BlockSpec((tk, h_pad), lambda i, k: (k, 0)),     # w1^T
                pl.BlockSpec((1, h_pad), lambda i, k: (0, 0)),      # b1
                pl.BlockSpec((h_pad, h_pad), lambda i, k: (0, 0)),  # w2^T
                pl.BlockSpec((1, h_pad), lambda i, k: (0, 0)),      # b2
            ],
            out_specs=pl.BlockSpec((tm, h_pad), lambda i, k: (i, 0)),
            scratch_shapes=[pltpu.VMEM((tm, h_pad), jnp.float32)],
        ),
        compiler_params=pltpu.CompilerParams(
            dimension_semantics=("parallel", "arbitrary"),
            vmem_limit_bytes=vmem_limit),
    )(x_p, w1_t, b1_p, w2_t, b2_p)

    return out_padded[:n, :hidden_dim]


def xavier_fill(key, shape):
    # Caffe2/Detectron XavierFill: U(-sqrt(3/fan_in), +sqrt(3/fan_in)).
    fan_in = shape[1]
    scale = jnp.sqrt(3.0 / fan_in)
    return jax.random.uniform(key, shape, jnp.float32, -scale, scale)


def _ref_forward(x_pooled, w1, b1, w2, b2):
    # Pure-JAX reference mirroring the kernel's bf16-input / fp32-accumulate math.
    n = x_pooled.shape[0]
    x = x_pooled.reshape(n, -1).astype(jnp.bfloat16).astype(jnp.float32)
    w1b = w1.astype(jnp.bfloat16).astype(jnp.float32)
    w2b = w2.astype(jnp.bfloat16).astype(jnp.float32)
    h = jnp.maximum(x @ w1b.T + b1, 0.0)
    h = h.astype(jnp.bfloat16).astype(jnp.float32)
    return jnp.maximum(h @ w2b.T + b2, 0.0)


if __name__ == "__main__":
    key = jax.random.PRNGKey(0)

    def run_case(num_rois, dim_in, roi_size, hidden_dim, key, *, prep_tk=1024, tm=None):
        d_in = dim_in * roi_size ** 2
        k_x, k_w1, k_w2, key = jax.random.split(key, 4)
        x_pooled = jax.random.normal(
            k_x, (num_rois, dim_in, roi_size, roi_size), jnp.float32)
        fc1_w = xavier_fill(k_w1, (hidden_dim, d_in))
        fc1_b = jnp.zeros((hidden_dim,), jnp.float32)
        fc2_w = xavier_fill(k_w2, (hidden_dim, hidden_dim))
        fc2_b = jnp.zeros((hidden_dim,), jnp.float32)

        params, tk = prepare_params(fc1_w, fc1_b, fc2_w, fc2_b, tk=prep_tk)
        out = roi_2mlp_head_forward(x_pooled, *params,
                                    hidden_dim=hidden_dim, tm=tm, tk=tk)
        out = jax.block_until_ready(out)
        ref = _ref_forward(x_pooled, fc1_w, fc1_b, fc2_w, fc2_b)
        assert out.shape == (num_rois, hidden_dim), out.shape
        err = float(jnp.max(jnp.abs(out - ref)))
        assert jnp.allclose(out, ref, atol=1e-2, rtol=1e-2), err
        return key

    # Case 1: tiny shapes, single-tile grid (1, 1).
    key = run_case(8, 4, 4, 32, key)

    # Case 2: row padding (N=20, tm=16 -> 2 row blocks) + 4-step K reduction.
    key = run_case(20, 8, 8, 32, key, prep_tk=128, tm=16)

    # Case 3: default tile planner (>256 ROIs -> two "parallel" row blocks).
    key = run_case(300, 16, 8, 64, key)

    print("KERNEL_OK")
</pallas_src>

<mosaic_0001>
module attributes {stable_mosaic.version = 11 : i64} {
  func.func @_mlp_head_kernel(%arg0: i32, %arg1: i32, %arg2: memref<8x128xbf16, #tpu.memory_space<vmem>>, %arg3: memref<128x128xbf16, #tpu.memory_space<vmem>>, %arg4: memref<1x128xf32, #tpu.memory_space<vmem>>, %arg5: memref<128x128xbf16, #tpu.memory_space<vmem>>, %arg6: memref<1x128xf32, #tpu.memory_space<vmem>>, %arg7: memref<8x128xf32, #tpu.memory_space<vmem>>, %arg8: memref<8x128xf32, #tpu.memory_space<vmem>>) attributes {dimension_semantics = [#tpu.dimension_semantics<parallel>, #tpu.dimension_semantics<arbitrary>], iteration_bounds = array<i64: 1, 1>, scalar_prefetch = 0 : i64, scratch_operands = 1 : i64, tpu.core_type = #tpu.core_type<tc>, window_params = [{transform_indices = @transform_0, window_bounds = array<i64: 8, 128>}, {transform_indices = @transform_1, window_bounds = array<i64: 128, 128>}, {pipeline_mode = #tpu.pipeline_mode<synchronous>, transform_indices = @transform_2, window_bounds = array<i64: 1, 128>}, {pipeline_mode = #tpu.pipeline_mode<synchronous>, transform_indices = @transform_3, window_bounds = array<i64: 128, 128>}, {pipeline_mode = #tpu.pipeline_mode<synchronous>, transform_indices = @transform_4, window_bounds = array<i64: 1, 128>}, {transform_indices = @transform_5, window_bounds = array<i64: 8, 128>}]} {
    %c0_i32 = arith.constant 0 : i32
    %0 = arith.cmpi eq, %arg1, %c0_i32 : i32
    %1 = arith.extui %0 : i1 to i32
    %c0_i32_0 = arith.constant 0 : i32
    %2 = arith.cmpi ne, %1, %c0_i32_0 : i32
    scf.if %2 {
      %cst_10 = arith.constant 0.000000e+00 : f32
      %12 = vector.broadcast %cst_10 : f32 to vector<8x128xf32>
      %c0_11 = arith.constant 0 : index
      %c0_12 = arith.constant 0 : index
      %13 = vector.load %arg8[%c0_11, %c0_12] : memref<8x128xf32, #tpu.memory_space<vmem>>, vector<8x128xf32>
      tpu.vector_store %arg8[%c0_11, %c0_12], %12 {strides = array<i32>} : memref<8x128xf32, #tpu.memory_space<vmem>>, vector<8x128xf32>,
    } else {
    }
    %c0 = arith.constant 0 : index
    %c0_1 = arith.constant 0 : index
    %3 = vector.load %arg8[%c0, %c0_1] : memref<8x128xf32, #tpu.memory_space<vmem>>, vector<8x128xf32>
    %c0_2 = arith.constant 0 : index
    %c0_3 = arith.constant 0 : index
    %4 = vector.load %arg2[%c0_2, %c0_3] : memref<8x128xbf16, #tpu.memory_space<vmem>>, vector<8x128xbf16>
    %c0_4 = arith.constant 0 : index
    %c0_5 = arith.constant 0 : index
    %5 = vector.load %arg3[%c0_4, %c0_5] : memref<128x128xbf16, #tpu.memory_space<vmem>>, vector<128x128xbf16>
    %cst = arith.constant dense<0.000000e+00> : vector<8x128xf32>
    %6 = tpu.matmul %4, %5, %cst {dimension_numbers = #tpu.dot_dimension_numbers<[1], [0], [0], [1], [0, 0, 1, 1], [], []>} : vector<8x128xbf16>, vector<128x128xbf16>, vector<8x128xf32> -> vector<8x128xf32>
    %7 = arith.addf %3, %6 : vector<8x128xf32>
    %c0_6 = arith.constant 0 : index
    %c0_7 = arith.constant 0 : index
    %8 = vector.load %arg8[%c0_6, %c0_7] : memref<8x128xf32, #tpu.memory_space<vmem>>, vector<8x128xf32>
    tpu.vector_store %arg8[%c0_6, %c0_7], %7 {strides = array<i32>} : memref<8x128xf32, #tpu.memory_space<vmem>>, vector<8x128xf32>,
    %c0_i32_8 = arith.constant 0 : i32
    %9 = arith.cmpi eq, %arg1, %c0_i32_8 : i32
    %10 = arith.extui %9 : i1 to i32
    %c0_i32_9 = arith.constant 0 : i32
    %11 = arith.cmpi ne, %10, %c0_i32_9 : i32
    scf.if %11 {
      %c0_10 = arith.constant 0 : index
      %c0_11 = arith.constant 0 : index
      %12 = vector.load %arg8[%c0_10, %c0_11] : memref<8x128xf32, #tpu.memory_space<vmem>>, vector<8x128xf32>
      %c0_12 = arith.constant 0 : index
      %c0_13 = arith.constant 0 : index
      %13 = vector.load %arg4[%c0_12, %c0_13] : memref<1x128xf32, #tpu.memory_space<vmem>>, vector<1x128xf32>
      %14 = vector.broadcast %13 : vector<1x128xf32> to vector<8x128xf32>
      %15 = arith.addf %12, %14 : vector<8x128xf32>
      %cst_14 = arith.constant 0.000000e+00 : f32
      %16 = vector.broadcast %cst_14 : f32 to vector<8x128xf32>
      %17 = arith.maximumf %15, %16 : vector<8x128xf32>
      %18 = arith.truncf %17 : vector<8x128xf32> to vector<8x128xbf16>
      %c0_15 = arith.constant 0 : index
      %c0_16 = arith.constant 0 : index
      %19 = vector.load %arg5[%c0_15, %c0_16] : memref<128x128xbf16, #tpu.memory_space<vmem>>, vector<128x128xbf16>
      %cst_17 = arith.constant dense<0.000000e+00> : vector<8x128xf32>
      %20 = tpu.matmul %18, %19, %cst_17 {dimension_numbers = #tpu.dot_dimension_numbers<[1], [0], [0], [1], [0, 0, 1, 1], [], []>} : vector<8x128xbf16>, vector<128x128xbf16>, vector<8x128xf32> -> vector<8x128xf32>
      %c0_18 = arith.constant 0 : index
      %c0_19 = arith.constant 0 : index
      %21 = vector.load %arg6[%c0_18, %c0_19] : memref<1x128xf32, #tpu.memory_space<vmem>>, vector<1x128xf32>
      %22 = vector.broadcast %21 : vector<1x128xf32> to vector<8x128xf32>
      %23 = arith.addf %20, %22 : vector<8x128xf32>
      %cst_20 = arith.constant 0.000000e+00 : f32
      %24 = vector.broadcast %cst_20 : f32 to vector<8x128xf32>
      %25 = arith.maximumf %23, %24 : vector<8x128xf32>
      %c0_21 = arith.constant 0 : index
      %c0_22 = arith.constant 0 : index
      %26 = vector.load %arg7[%c0_21, %c0_22] : memref<8x128xf32, #tpu.memory_space<vmem>>, vector<8x128xf32>
      tpu.vector_store %arg7[%c0_21, %c0_22], %25 {strides = array<i32>} : memref<8x128xf32, #tpu.memory_space<vmem>>, vector<8x128xf32>,
    } else {
    }
    return
  }
  func.func @transform_0(%arg0: i32, %arg1: i32) -> (i32, i32) {
    %c0_i32 = arith.constant 0 : i32
    return %arg0, %arg1 : i32, i32
  }
  func.func @transform_1(%arg0: i32, %arg1: i32) -> (i32, i32) {
    %c0_i32 = arith.constant 0 : i32
    %c0_i32_0 = arith.constant 0 : i32
    return %arg1, %c0_i32 : i32, i32
  }
  func.func @transform_2(%arg0: i32, %arg1: i32) -> (i32, i32) {
    %c0_i32 = arith.constant 0 : i32
    %c0_i32_0 = arith.constant 0 : i32
    %c0_i32_1 = arith.constant 0 : i32
    return %c0_i32, %c0_i32_0 : i32, i32
  }
  func.func @transform_3(%arg0: i32, %arg1: i32) -> (i32, i32) {
    %c0_i32 = arith.constant 0 : i32
    %c0_i32_0 = arith.constant 0 : i32
    %c0_i32_1 = arith.constant 0 : i32
    return %c0_i32, %c0_i32_0 : i32, i32
  }
  func.func @transform_4(%arg0: i32, %arg1: i32) -> (i32, i32) {
    %c0_i32 = arith.constant 0 : i32
    %c0_i32_0 = arith.constant 0 : i32
    %c0_i32_1 = arith.constant 0 : i32
    return %c0_i32, %c0_i32_0 : i32, i32
  }
  func.func @transform_5(%arg0: i32, %arg1: i32) -> (i32, i32) {
    %c0_i32 = arith.constant 0 : i32
    %c0_i32_0 = arith.constant 0 : i32
    return %arg0, %c0_i32 : i32, i32
  }
}

</mosaic_0001>

<llo_original>
// kernel: roi_2mlp_head_forward.1
$region0: #{roi_2mlp_head_forward.1}
  #allocation0 [shape = 'u32[]', space=smem, size = 0x4, offset = 0x4, fixed_abs, tag = 'smem constant byte address 0x4 - core index']
  #allocation1 [shape = 'u32[72,128]{1,0:T(1,128)}', space=vmem, size = 0x9000, scoped, tag = 'internal scratch']
  #allocation2 [shape = 'f32[8,128]{1,0:T(8,128)}', space=vmem, size = 0x1000, scoped, tag = 'scratch operand']
  %s0 = inlined_call_operand.vmem [shape: bf16[8,128], index: 0, kind: input, shape index: {}]
  %s1 = inlined_call_operand.vmem [shape: bf16[128,128], index: 1, kind: input, shape index: {}]
  %s2 = inlined_call_operand.vmem [shape: f32[1,128], index: 2, kind: input, shape index: {}]
  %s3 = inlined_call_operand.vmem [shape: bf16[128,128], index: 3, kind: input, shape index: {}]
  %s4 = inlined_call_operand.vmem [shape: f32[1,128], index: 4, kind: input, shape index: {}]
  %s5 = inlined_call_operand.hbm [shape: f32[8,128], index: 5, kind: output, shape index: {}]
  %s6 = sld [smem:[#allocation0]]
  $region38: #{roi_2mlp_head_forward.1} parent=0
    _
  %s8 = ssub.s32 1, %s6
  %s9 = scalar_select 0, %s8, %s6
  $region1: #{roi_2mlp_head_forward.1} parent=0
    #allocation3 [shape = 'u8[4096]{0}', space=vmem, size = 0x1000, scoped, tag = 'output window, operand 0, single buffered']
    #allocation4 [shape = 's32[1]{0}', space=sflag, size = 0x4, scoped, tag = 'scoped memory for roi_2mlp_head_forward.1']
    %10 = vsyncpa [#allocation4], 0
    // Predicated region
    $region2: #{roi_2mlp_head_forward.1} parent=1 // pred_check
      _
    $region3: #{roi_2mlp_head_forward.1} parent=1 // pred_check_branch
      %12 = sbr.rel (0) target = $region5
    $region4: #{roi_2mlp_head_forward.1} parent=1 // pred_region
      _
    $region5: #{roi_2mlp_head_forward.1} parent=1 // pred_fallthru
      _
    // Predicated region
    $region6: #{roi_2mlp_head_forward.1} parent=1 // pred_check
      _
    $region7: #{roi_2mlp_head_forward.1} parent=1 // pred_check_branch
      %14 = sbr.rel (0) target = $region9
    $region8: #{roi_2mlp_head_forward.1} parent=1 // pred_region
      _
    $region9: #{roi_2mlp_head_forward.1} parent=1 // pred_fallthru
      _
    // Predicated region
    $region10: #{roi_2mlp_head_forward.1} parent=1 // pred_check
      _
    $region11: #{roi_2mlp_head_forward.1} parent=1 // pred_check_branch
      %16 = sbr.rel (0) target = $region13
    $region12: #{roi_2mlp_head_forward.1} parent=1 // pred_region
      _
    $region13: #{roi_2mlp_head_forward.1} parent=1 // pred_fallthru
      _
    // Predicated region
    $region14: #{roi_2mlp_head_forward.1} parent=1 // pred_check
      _
    $region15: #{roi_2mlp_head_forward.1} parent=1 // pred_check_branch
      %18 = sbr.rel (0) target = $region17
    $region16: #{roi_2mlp_head_forward.1} parent=1 // pred_region
      _
    $region17: #{roi_2mlp_head_forward.1} parent=1 // pred_fallthru
      _
    // Predicated region
    $region18: #{roi_2mlp_head_forward.1} parent=1 // pred_check
      _
    $region19: #{roi_2mlp_head_forward.1} parent=1 // pred_check_branch
      %20 = sbr.rel (0) target = $region21
    $region20: #{roi_2mlp_head_forward.1} parent=1 // pred_region
      _
    $region21: #{roi_2mlp_head_forward.1} parent=1 // pred_fallthru
      _
    %p21 = scmp.eq.s32.totalorder 0, 0
    // Predicated region
    $region22: #{roi_2mlp_head_forward.1} parent=1 // pred_check
      %p22 = pneg %p21
    $region23: #{roi_2mlp_head_forward.1} parent=1 // pred_check_branch
      %24 = sbr.rel (%p22) target = $region25
    $region24: #{roi_2mlp_head_forward.1} parent=1 // pred_region
      %25 = vst [vmem:[#allocation2] sm:$0xff] 0.0
    $region25: #{roi_2mlp_head_forward.1} parent=1 // pred_fallthru
      _
    %v26 = vld [vmem:[#allocation2] sm:$0xff]
    %v27 = vld [vmem:[%s0] sm:$0xf]
    %v28 = vld [vmem:[%s1] sm:$0xf]
    %v29 = vld [vmem:[%s1 + $0x4] sm:$0xf]
    %v30 = vld [vmem:[%s1 + $0x8] sm:$0xf]
    %v31 = vld [vmem:[%s1 + $0xc] sm:$0xf]
    %v32 = vld [vmem:[%s1 + $0x10] sm:$0xf]
    %v33 = vld [vmem:[%s1 + $0x14] sm:$0xf]
    %v34 = vld [vmem:[%s1 + $0x18] sm:$0xf]
    %v35 = vld [vmem:[%s1 + $0x1c] sm:$0xf]
    %v36 = vld [vmem:[%s1 + $0x20] sm:$0xf]
    %v37 = vld [vmem:[%s1 + $0x24] sm:$0xf]
    %v38 = vld [vmem:[%s1 + $0x28] sm:$0xf]
    %v39 = vld [vmem:[%s1 + $0x2c] sm:$0xf]
    %v40 = vld [vmem:[%s1 + $0x30] sm:$0xf]
    %v41 = vld [vmem:[%s1 + $0x34] sm:$0xf]
    %v42 = vld [vmem:[%s1 + $0x38] sm:$0xf]
    %v43 = vld [vmem:[%s1 + $0x3c] sm:$0xf]
    %v60 = vunpack.c.l.b16 %v28
    %v61 = vunpack.c.l.b16 %v29
    %v62 = vunpack.c.l.b16 %v30
    %v63 = vunpack.c.l.b16 %v31
    %v64 = vunpack.c.l.b16 %v32
    %v65 = vunpack.c.l.b16 %v33
    %v66 = vunpack.c.l.b16 %v34
    %v67 = vunpack.c.l.b16 %v35
    %v68 = vunpack.c.l.b16 %v36
    %v69 = vunpack.c.l.b16 %v37
    %v70 = vunpack.c.l.b16 %v38
    %v71 = vunpack.c.l.b16 %v39
    %v72 = vunpack.c.l.b16 %v40
    %v73 = vunpack.c.l.b16 %v41
    %v74 = vunpack.c.l.b16 %v42
    %v75 = vunpack.c.l.b16 %v43
    %v76 = vpack.c.b16 %v61, %v60
    %v77 = vpack.c.b16 %v63, %v62
    %v78 = vpack.c.b16 %v65, %v64
    %v79 = vpack.c.b16 %v67, %v66
    %v80 = vpack.c.b16 %v69, %v68
    %v81 = vpack.c.b16 %v71, %v70
    %v82 = vpack.c.b16 %v73, %v72
    %v83 = vpack.c.b16 %v75, %v74
    %92 = vmatpush.bf16.msra.mxu0 %v83
    %93 = vmatpush.bf16.msra.mxu0 %v82
    %94 = vmatpush.bf16.msra.mxu0 %v81
    %95 = vmatpush.bf16.msra.mxu0 %v80
    %96 = vmatpush.bf16.msra.mxu0 %v79
    %97 = vmatpush.bf16.msra.mxu0 %v78
    %98 = vmatpush.bf16.msra.mxu0 %v77
    %99 = vmatpush.bf16.msra.mxu0 %v76
    %100 = vmatmul.bf16.gmra.mxu0 %v27
    %v101 = vpop.f32.mrf.mxu0
    %v102 = vadd.f32 0.0, %v101
    %v103 = vpop.f32.mrf.mxu0
    %104 = vdwg.mxu0
    %v105 = vadd.f32 %v26, %v102
    %106 = vst [vmem:[#allocation2] sm:$0xff] %v105
    // Predicated region
    $region26: #{roi_2mlp_head_forward.1} parent=1 // pred_check
      %p107 = pneg %p21
    $region27: #{roi_2mlp_head_forward.1} parent=1 // pred_check_branch
      %109 = sbr.rel (%p107) target = $region29
    $region28: #{roi_2mlp_head_forward.1} parent=1 // pred_region
      %v110 = vld [vmem:[#allocation2] sm:$0xff]
      %v111 = vld [vmem:[%s2] sm:$0x1]
      %v113 = vperm.slane %v111, 0
      %v115 = vadd.f32 %v110, %v113
      %v116 = vmax.f32 %v115, 0.0
      %v117 = vpack.c.bf16 %v116, %v116
      %v118 = vld [vmem:[%s3] sm:$0xf]
      %v119 = vld [vmem:[%s3 + $0x4] sm:$0xf]
      %v120 = vld [vmem:[%s3 + $0x8] sm:$0xf]
      %v121 = vld [vmem:[%s3 + $0xc] sm:$0xf]
      %v122 = vld [vmem:[%s3 + $0x10] sm:$0xf]
      %v123 = vld [vmem:[%s3 + $0x14] sm:$0xf]
      %v124 = vld [vmem:[%s3 + $0x18] sm:$0xf]
      %v125 = vld [vmem:[%s3 + $0x1c] sm:$0xf]
      %v126 = vld [vmem:[%s3 + $0x20] sm:$0xf]
      %v127 = vld [vmem:[%s3 + $0x24] sm:$0xf]
      %v128 = vld [vmem:[%s3 + $0x28] sm:$0xf]
      %v129 = vld [vmem:[%s3 + $0x2c] sm:$0xf]
      %v130 = vld [vmem:[%s3 + $0x30] sm:$0xf]
      %v131 = vld [vmem:[%s3 + $0x34] sm:$0xf]
      %v132 = vld [vmem:[%s3 + $0x38] sm:$0xf]
      %v133 = vld [vmem:[%s3 + $0x3c] sm:$0xf]
      %v134 = vld [vmem:[%s4] sm:$0x1]
      %v136 = vperm.slane %v134, 0
      %v154 = vunpack.c.l.b16 %v118
      %v155 = vunpack.c.l.b16 %v119
      %v156 = vunpack.c.l.b16 %v120
      %v157 = vunpack.c.l.b16 %v121
      %v158 = vunpack.c.l.b16 %v122
      %v159 = vunpack.c.l.b16 %v123
      %v160 = vunpack.c.l.b16 %v124
      %v161 = vunpack.c.l.b16 %v125
      %v162 = vunpack.c.l.b16 %v126
      %v163 = vunpack.c.l.b16 %v127
      %v164 = vunpack.c.l.b16 %v128
      %v165 = vunpack.c.l.b16 %v129
      %v166 = vunpack.c.l.b16 %v130
      %v167 = vunpack.c.l.b16 %v131
      %v168 = vunpack.c.l.b16 %v132
      %v169 = vunpack.c.l.b16 %v133
      %v170 = vpack.c.b16 %v155, %v154
      %v171 = vpack.c.b16 %v157, %v156
      %v172 = vpack.c.b16 %v159, %v158
      %v173 = vpack.c.b16 %v161, %v160
      %v174 = vpack.c.b16 %v163, %v162
      %v175 = vpack.c.b16 %v165, %v164
      %v176 = vpack.c.b16 %v167, %v166
      %v177 = vpack.c.b16 %v169, %v168
      %186 = vmatpush.bf16.msra.mxu0 %v177
      %187 = vmatpush.bf16.msra.mxu0 %v176
      %188 = vmatpush.bf16.msra.mxu0 %v175
      %189 = vmatpush.bf16.msra.mxu0 %v174
      %190 = vmatpush.bf16.msra.mxu0 %v173
      %191 = vmatpush.bf16.msra.mxu0 %v172
      %192 = vmatpush.bf16.msra.mxu0 %v171
      %193 = vmatpush.bf16.msra.mxu0 %v170
      %194 = vmatmul.bf16.gmra.mxu0 %v117
      %v195 = vpop.f32.mrf.mxu0
      %v196 = vadd.f32 %v136, %v195
      %v197 = vpop.f32.mrf.mxu0
      %198 = vdwg.mxu0
      %v199 = vmax.f32 %v196, 0.0
      %200 = vst [vmem:[#allocation3] sm:$0xff] %v199
    $region29: #{roi_2mlp_head_forward.1} parent=1 // pred_fallthru
      _
    // Predicated region
    $region30: #{roi_2mlp_head_forward.1} parent=1 // pred_check
      _
    $region31: #{roi_2mlp_head_forward.1} parent=1 // pred_check_branch
      %202 = sbr.rel (0) target = $region33
    $region32: #{roi_2mlp_head_forward.1} parent=1 // pred_region
      %204 = vsyncadd [#allocation4], 0
      %s206 = sshll.u32 [#allocation3], 4
      %s207 = int_to_ptr.vmem [resolvable:$true] %s206
      %s208 = sshll.u32 %s5, 4
      %s209 = int_to_ptr.hbm [resolvable:$true] %s208
      %211 = dma.vmem_to_hbm [thread:$0]  %s207, 128, %s209, [#allocation4]
    $region33: #{roi_2mlp_head_forward.1} parent=1 // pred_fallthru
      _
    // Predicated region
    $region34: #{roi_2mlp_head_forward.1} parent=1 // pred_check
      _
    $region35: #{roi_2mlp_head_forward.1} parent=1 // pred_check_branch
      %213 = sbr.rel (0) target = $region37
    $region36: #{roi_2mlp_head_forward.1} parent=1 // pred_region
      %215 = dma.done [#allocation4], 128
    $region37: #{roi_2mlp_head_forward.1} parent=1 // pred_fallthru
      _
    %216 = vsyncpa [#allocation4], 1

</llo_original>
